<compile_context>
chip_gen: v5e
topology: v5e:2x2
jax: 0.10.0
libtpu: 0.0.40
codegen_flags: <defaults>
</compile_context>

<pallas_src>
import jax
import jax.numpy as jnp
from jax.experimental import pallas as pl
from jax.experimental.pallas import tpu as pltpu


_LANE = 128
_MAX_TILE = 32768          # lanes per grid step (~1 MiB per f32 input buffer incl. sublane pad)
_PALLAS_MIN_BATCH = 2048   # below this, launch overhead dominates -> plain jnp


def _round_up(x, m):
    return ((x + m - 1) // m) * m


def _rotation_scale(block_width, block_length):
    return float(((block_length ** 2 + block_width ** 2) / 12.0) ** 0.5)


def _make_kernel(rg, batch_size):
    inv_b = 1.0 / float(batch_size)

    def kernel(pred_ref, targ_ref, out_ref, acc_ref):
        # pred_ref / targ_ref: (3, TILE) lane-dense blocks.
        # acc_ref: (3, 1) f32 running per-component sum of squared diffs.
        @pl.when(pl.program_id(0) == 0)
        def _():
            acc_ref[...] = jnp.zeros_like(acc_ref)

        d = pred_ref[...].astype(jnp.float32) - targ_ref[...].astype(jnp.float32)
        # Reduce first (lane reduction), weight second.
        acc_ref[...] += jnp.sum(d * d, axis=-1, keepdims=True)          # (3, 1)

        @pl.when(pl.program_id(0) == pl.num_programs(0) - 1)
        def _():
            ridx = jax.lax.broadcasted_iota(jnp.int32, acc_ref.shape, 0)
            w = jnp.where(ridx == 2, rg, 1.0).astype(jnp.float32)       # [1, 1, rg]^T
            tot = jnp.sum(acc_ref[...] * w, axis=0, keepdims=True)      # (1, 1)
            out_ref[...] = tot * inv_b

    return kernel


def se2_pose_loss_pallas(pose_pred, pose_target, block_width, block_length):
    """Pallas implementation of SE2PoseLoss.forward (scalar f32 result)."""
    rg = _rotation_scale(block_width, block_length)
    B, D = pose_pred.shape
    assert D == 3, "SE(2) pose must have 3 components [x, y, theta]"

    tile = min(_MAX_TILE, _round_up(B, _LANE))
    Bp = _round_up(B, tile)

    # Lane-dense layout: components -> sublanes, batch -> lanes.  Zero padding
    # in BOTH operands contributes zero to the sums, so it is harmless.
    pred_t = jnp.pad(pose_pred.T, ((0, 0), (0, Bp - B)))
    targ_t = jnp.pad(pose_target.T, ((0, 0), (0, Bp - B)))

    out = pl.pallas_call(
        _make_kernel(rg, B),
        out_shape=jax.ShapeDtypeStruct((1, 1), jnp.float32),
        grid_spec=pltpu.PrefetchScalarGridSpec(
            num_scalar_prefetch=0,
            grid=(Bp // tile,),
            in_specs=[
                pl.BlockSpec((D, tile), lambda i: (0, i)),
                pl.BlockSpec((D, tile), lambda i: (0, i)),
            ],
            out_specs=pl.BlockSpec((1, 1), lambda i: (0, 0)),
            scratch_shapes=[pltpu.VMEM((D, 1), jnp.float32)],
        ),
        compiler_params=pltpu.CompilerParams(
            dimension_semantics=("arbitrary",)),
    )(pred_t, targ_t)
    return out[0, 0]


def _se2_pose_loss_jnp(pose_pred, pose_target, block_width, block_length):
    rg = _rotation_scale(block_width, block_length)
    d = (pose_pred - pose_target).astype(jnp.float32)
    m = jnp.mean(d * d, axis=0)
    return m[0] + m[1] + rg * m[2]


def se2_pose_loss(pose_pred, pose_target, block_width, block_length,
                  *, force_pallas=False):
    """JAX equivalent of SE2PoseLoss(block_width, block_length).forward."""
    B = pose_pred.shape[0]
    if not force_pallas and B < _PALLAS_MIN_BATCH:
        # Tiny problem: pallas_call fixed cost dwarfs the work; let XLA fuse it.
        return _se2_pose_loss_jnp(pose_pred, pose_target, block_width, block_length)
    return se2_pose_loss_pallas(pose_pred, pose_target, block_width, block_length)


def _reference_loss(pose_pred, pose_target, block_width, block_length):
    rg = _rotation_scale(block_width, block_length)
    t = (jnp.mean((pose_pred[:, 0] - pose_target[:, 0]) ** 2)
         + jnp.mean((pose_pred[:, 1] - pose_target[:, 1]) ** 2))
    r = rg * jnp.mean((pose_pred[:, 2] - pose_target[:, 2]) ** 2)
    return t + r


if __name__ == "__main__":
    block_width = 0.1
    block_length = 0.2

    key = jax.random.PRNGKey(0)
    k1, k2, k3, k4 = jax.random.split(key, 4)

    # --- Small batch: force the Pallas path (single grid step) ------------
    B = 8
    pose_pred = jax.random.normal(k1, (B, 3), dtype=jnp.float32)
    pose_target = jax.random.normal(k2, (B, 3), dtype=jnp.float32)

    loss = se2_pose_loss(pose_pred, pose_target, block_width, block_length,
                         force_pallas=True)
    loss = jax.block_until_ready(loss)
    ref = _reference_loss(pose_pred, pose_target, block_width, block_length)
    assert jnp.allclose(loss, ref, rtol=1e-5, atol=1e-6), (loss, ref)

    # Dispatcher at tiny batch takes the fused jnp path; must agree too.
    loss_jnp = jax.block_until_ready(
        se2_pose_loss(pose_pred, pose_target, block_width, block_length))
    assert jnp.allclose(loss_jnp, ref, rtol=1e-5, atol=1e-6), (loss_jnp, ref)

    # --- Larger batch: multiple grid steps, exercises accumulation --------
    B2 = 70000  # > _MAX_TILE -> 3 grid steps (incl. zero-padded tail)
    pred2 = jax.random.normal(k3, (B2, 3), dtype=jnp.float32)
    targ2 = jax.random.normal(k4, (B2, 3), dtype=jnp.float32)

    loss2 = jax.block_until_ready(
        se2_pose_loss(pred2, targ2, block_width, block_length))
    ref2 = _reference_loss(pred2, targ2, block_width, block_length)
    assert jnp.allclose(loss2, ref2, rtol=1e-4, atol=1e-6), (loss2, ref2)

    print("KERNEL_OK")
</pallas_src>

<mosaic_0001>
module attributes {stable_mosaic.version = 11 : i64} {
  func.func @kernel(%arg0: i32, %arg1: memref<3x128xf32, #tpu.memory_space<vmem>>, %arg2: memref<3x128xf32, #tpu.memory_space<vmem>>, %arg3: memref<1x1xf32, #tpu.memory_space<vmem>>, %arg4: memref<3x1xf32, #tpu.memory_space<vmem>>) attributes {dimension_semantics = [#tpu.dimension_semantics<arbitrary>], iteration_bounds = array<i64: 1>, scalar_prefetch = 0 : i64, scratch_operands = 1 : i64, tpu.core_type = #tpu.core_type<tc>, window_params = [{transform_indices = @transform_0, window_bounds = array<i64: 3, 128>}, {transform_indices = @transform_1, window_bounds = array<i64: 3, 128>}, {pipeline_mode = #tpu.pipeline_mode<synchronous>, transform_indices = @transform_2, window_bounds = array<i64: 1, 1>}]} {
    %c0_i32 = arith.constant 0 : i32
    %0 = arith.cmpi eq, %arg0, %c0_i32 : i32
    %1 = arith.extui %0 : i1 to i32
    %c0_i32_0 = arith.constant 0 : i32
    %2 = arith.cmpi ne, %1, %c0_i32_0 : i32
    scf.if %2 {
      %cst_10 = arith.constant 0.000000e+00 : f32
      %15 = vector.broadcast %cst_10 : f32 to vector<3x1xf32>
      %c0_11 = arith.constant 0 : index
      %c0_12 = arith.constant 0 : index
      %16 = vector.load %arg4[%c0_11, %c0_12] : memref<3x1xf32, #tpu.memory_space<vmem>>, vector<3x1xf32>
      tpu.vector_store %arg4[%c0_11, %c0_12], %15 {strides = array<i32>} : memref<3x1xf32, #tpu.memory_space<vmem>>, vector<3x1xf32>,
    } else {
    }
    %c0 = arith.constant 0 : index
    %c0_1 = arith.constant 0 : index
    %3 = vector.load %arg1[%c0, %c0_1] : memref<3x128xf32, #tpu.memory_space<vmem>>, vector<3x128xf32>
    %c0_2 = arith.constant 0 : index
    %c0_3 = arith.constant 0 : index
    %4 = vector.load %arg2[%c0_2, %c0_3] : memref<3x128xf32, #tpu.memory_space<vmem>>, vector<3x128xf32>
    %5 = arith.subf %3, %4 : vector<3x128xf32>
    %c0_4 = arith.constant 0 : index
    %c0_5 = arith.constant 0 : index
    %6 = vector.load %arg4[%c0_4, %c0_5] : memref<3x1xf32, #tpu.memory_space<vmem>>, vector<3x1xf32>
    %7 = arith.mulf %5, %5 : vector<3x128xf32>
    %cst = arith.constant dense<0.000000e+00> : vector<3xf32>
    %8 = vector.multi_reduction <add>, %7, %cst [1] : vector<3x128xf32> to vector<3xf32>
    %9 = vector.shape_cast %8 : vector<3xf32> to vector<3x1xf32>
    %10 = arith.addf %6, %9 : vector<3x1xf32>
    %c0_6 = arith.constant 0 : index
    %c0_7 = arith.constant 0 : index
    %11 = vector.load %arg4[%c0_6, %c0_7] : memref<3x1xf32, #tpu.memory_space<vmem>>, vector<3x1xf32>
    tpu.vector_store %arg4[%c0_6, %c0_7], %10 {strides = array<i32>} : memref<3x1xf32, #tpu.memory_space<vmem>>, vector<3x1xf32>,
    %c0_i32_8 = arith.constant 0 : i32
    %12 = arith.cmpi eq, %arg0, %c0_i32_8 : i32
    %13 = arith.extui %12 : i1 to i32
    %c0_i32_9 = arith.constant 0 : i32
    %14 = arith.cmpi ne, %13, %c0_i32_9 : i32
    scf.if %14 {
      %15 = tpu.iota {dimensions = array<i32: 0>} : vector<3x1xi32>
      %c2_i32 = arith.constant 2 : i32
      %16 = vector.broadcast %c2_i32 : i32 to vector<3x1xi32>
      %17 = arith.cmpi eq, %15, %16 : vector<3x1xi32>
      %cst_10 = arith.constant 0.0645497218 : f32
      %cst_11 = arith.constant 1.000000e+00 : f32
      %18 = vector.broadcast %cst_10 : f32 to vector<3x1xf32>
      %19 = vector.broadcast %cst_11 : f32 to vector<3x1xf32>
      %20 = arith.select %17, %18, %19 : vector<3x1xi1>, vector<3x1xf32>
      %c0_12 = arith.constant 0 : index
      %c0_13 = arith.constant 0 : index
      %21 = vector.load %arg4[%c0_12, %c0_13] : memref<3x1xf32, #tpu.memory_space<vmem>>, vector<3x1xf32>
      %22 = arith.mulf %21, %20 : vector<3x1xf32>
      %cst_14 = arith.constant dense<0.000000e+00> : vector<1xf32>
      %23 = vector.multi_reduction <add>, %22, %cst_14 [0] : vector<3x1xf32> to vector<1xf32>
      %24 = vector.shape_cast %23 : vector<1xf32> to vector<1x1xf32>
      %cst_15 = arith.constant 1.250000e-01 : f32
      %25 = vector.broadcast %cst_15 : f32 to vector<1x1xf32>
      %26 = arith.mulf %24, %25 : vector<1x1xf32>
      %c0_16 = arith.constant 0 : index
      %c0_17 = arith.constant 0 : index
      %27 = vector.load %arg3[%c0_16, %c0_17] : memref<1x1xf32, #tpu.memory_space<vmem>>, vector<1x1xf32>
      tpu.vector_store %arg3[%c0_16, %c0_17], %26 {strides = array<i32>} : memref<1x1xf32, #tpu.memory_space<vmem>>, vector<1x1xf32>,
    } else {
    }
    return
  }
  func.func @transform_0(%arg0: i32) -> (i32, i32) {
    %c0_i32 = arith.constant 0 : i32
    %c0_i32_0 = arith.constant 0 : i32
    return %c0_i32, %arg0 : i32, i32
  }
  func.func @transform_1(%arg0: i32) -> (i32, i32) {
    %c0_i32 = arith.constant 0 : i32
    %c0_i32_0 = arith.constant 0 : i32
    return %c0_i32, %arg0 : i32, i32
  }
  func.func @transform_2(%arg0: i32) -> (i32, i32) {
    %c0_i32 = arith.constant 0 : i32
    %c0_i32_0 = arith.constant 0 : i32
    %c0_i32_1 = arith.constant 0 : i32
    return %c0_i32, %c0_i32_0 : i32, i32
  }
}

</mosaic_0001>

<llo_original>
// kernel: tpu_custom_call.1
$region0: #{tpu_custom_call.1}
  #allocation0 [shape = 'u32[]', space=smem, size = 0x4, offset = 0x4, fixed_abs, tag = 'smem constant byte address 0x4 - core index']
  #allocation1 [shape = 'u32[72,128]{1,0:T(1,128)}', space=vmem, size = 0x9000, scoped, tag = 'internal scratch']
  #allocation2 [shape = 'f32[3,1]{1,0:T(4,128)}', space=vmem, size = 0x800, scoped, tag = 'scratch operand']
  %s0 = inlined_call_operand.hbm [shape: f32[3,128], index: 0, kind: input, shape index: {}]
  %s1 = inlined_call_operand.hbm [shape: f32[3,128], index: 1, kind: input, shape index: {}]
  %s2 = inlined_call_operand.hbm [shape: f32[1,1], index: 2, kind: output, shape index: {}]
  %s3 = sld [smem:[#allocation0]]
  $region34: #{tpu_custom_call.1} parent=0
    _
  %s5 = ssub.s32 1, %s3
  %s6 = scalar_select 0, %s5, %s3
  $region1: #{tpu_custom_call.1} parent=0
    #allocation3 [shape = 'u8[2048]{0}', space=vmem, size = 0x800, scoped, tag = 'input window, operand 0, single buffered']
    #allocation4 [shape = 's32[1]{0}', space=sflag, size = 0x4, scoped, tag = 'scoped memory for tpu_custom_call.1']
    #allocation5 [shape = 's32[1]{0}', space=sflag, size = 0x4, scoped, tag = 'scoped memory for tpu_custom_call.1']
    #allocation6 [shape = 'u8[2048]{0}', space=vmem, size = 0x800, scoped, tag = 'input window, operand 1, single buffered']
    #allocation7 [shape = 's32[1]{0}', space=sflag, size = 0x4, scoped, tag = 'scoped memory for tpu_custom_call.1']
    #allocation8 [shape = 'u8[512]{0}', space=vmem, size = 0x400, scoped, tag = 'output window, operand 0, single buffered']
    %7 = vsyncpa [#allocation4], 0
    %8 = vsyncpa [#allocation7], 0
    %9 = vsyncpa [#allocation5], 0
    // Predicated region
    $region2: #{tpu_custom_call.1} parent=1 // pred_check
      _
    $region3: #{tpu_custom_call.1} parent=1 // pred_check_branch
      %11 = sbr.rel (0) target = $region5
    $region4: #{tpu_custom_call.1} parent=1 // pred_region
      %13 = vsyncadd [#allocation4], 0
      %s15 = sshll.u32 %s0, 4
      %s16 = int_to_ptr.hbm [resolvable:$true] %s15
      %s17 = sshll.u32 [#allocation3], 4
      %s18 = int_to_ptr.vmem [resolvable:$true] %s17
      %20 = dma.hbm_to_vmem [thread:$0]  %s16, 64, %s18, [#allocation4]
    $region5: #{tpu_custom_call.1} parent=1 // pred_fallthru
      _
    // Predicated region
    $region6: #{tpu_custom_call.1} parent=1 // pred_check
      _
    $region7: #{tpu_custom_call.1} parent=1 // pred_check_branch
      %22 = sbr.rel (0) target = $region9
    $region8: #{tpu_custom_call.1} parent=1 // pred_region
      %24 = vsyncadd [#allocation7], 0
      %s26 = sshll.u32 %s1, 4
      %s27 = int_to_ptr.hbm [resolvable:$true] %s26
      %s28 = sshll.u32 [#allocation6], 4
      %s29 = int_to_ptr.vmem [resolvable:$true] %s28
      %31 = dma.hbm_to_vmem [thread:$0]  %s27, 64, %s29, [#allocation7]
    $region9: #{tpu_custom_call.1} parent=1 // pred_fallthru
      _
    // Predicated region
    $region10: #{tpu_custom_call.1} parent=1 // pred_check
      _
    $region11: #{tpu_custom_call.1} parent=1 // pred_check_branch
      %33 = sbr.rel (0) target = $region13
    $region12: #{tpu_custom_call.1} parent=1 // pred_region
      %35 = dma.done [#allocation4], 64
    $region13: #{tpu_custom_call.1} parent=1 // pred_fallthru
      _
    // Predicated region
    $region14: #{tpu_custom_call.1} parent=1 // pred_check
      _
    $region15: #{tpu_custom_call.1} parent=1 // pred_check_branch
      %37 = sbr.rel (0) target = $region17
    $region16: #{tpu_custom_call.1} parent=1 // pred_region
      %39 = dma.done [#allocation7], 64
    $region17: #{tpu_custom_call.1} parent=1 // pred_fallthru
      _
    %p40 = scmp.eq.s32.totalorder 0, 0
    // Predicated region
    $region18: #{tpu_custom_call.1} parent=1 // pred_check
      %p41 = pneg %p40
    $region19: #{tpu_custom_call.1} parent=1 // pred_check_branch
      %43 = sbr.rel (%p41) target = $region21
    $region20: #{tpu_custom_call.1} parent=1 // pred_region
      %vm44 = vcmask 2048
      %45 = vst.msk [vmem:[#allocation2] sm:$0x7] %vm44, 0.0
    $region21: #{tpu_custom_call.1} parent=1 // pred_fallthru
      _
    %v46 = vld [vmem:[#allocation3] sm:$0x7]
    %v47 = vld [vmem:[#allocation6] sm:$0x7]
    %v48 = vsub.f32 %v46, %v47
    %v49 = vld [vmem:[#allocation2] sm:$0x7]
    %v50 = vmul.f32 %v48, %v48
    %vm51 = vcmask 1042432
    %v52 = vsel %vm51, %v50, 0.0
    %53 = vadd.xlane.f32.xlu0 %v52
    %v54 = vpop.xlane.xlu0 %53
    %v55 = vadd.f32 %v49, %v54
    %vm56 = vcmask 2048
    %57 = vst.msk [vmem:[#allocation2] sm:$0x7] %vm56, %v55
    // Predicated region
    $region22: #{tpu_custom_call.1} parent=1 // pred_check
      %p58 = pneg %p40
    $region23: #{tpu_custom_call.1} parent=1 // pred_check_branch
      %60 = sbr.rel (%p58) target = $region25
    $region24: #{tpu_custom_call.1} parent=1 // pred_region
      %v61 = vlaneseq
      %v62 = vshrl.u32 %v61, 7
      %vm63 = vcmp.eq.s32.totalorder %v62, 2
      %v64 = vsel %vm63, 0.06454972, 1.0
      %v65 = vld [vmem:[#allocation2] sm:$0x7]
      %v66 = vmul.f32 %v65, %v64
      %v67 = vsel %vm56, %v66, 0.0
      %v68 = vrot.slane %v67, 4
      %v69 = vadd.f32 %v67, %v68
      %v70 = vrot.slane %v69, 2
      %v71 = vadd.f32 %v69, %v70
      %v72 = vrot.slane %v71, 1
      %v73 = vadd.f32 %v71, %v72
      %v74 = vmul.f32 %v73, 0.125
      %vm75 = vcmask 0
      %76 = vst.msk [vmem:[#allocation8] sm:$0x1] %vm75, %v74
    $region25: #{tpu_custom_call.1} parent=1 // pred_fallthru
      _
    // Predicated region
    $region26: #{tpu_custom_call.1} parent=1 // pred_check
      _
    $region27: #{tpu_custom_call.1} parent=1 // pred_check_branch
      %78 = sbr.rel (0) target = $region29
    $region28: #{tpu_custom_call.1} parent=1 // pred_region
      %80 = vsyncadd [#allocation5], 0
      %s82 = sshll.u32 [#allocation8], 4
      %s83 = int_to_ptr.vmem [resolvable:$true] %s82
      %s84 = sshll.u32 %s2, 4
      %s85 = int_to_ptr.hbm [resolvable:$true] %s84
      %87 = dma.vmem_to_hbm [thread:$0]  %s83, 16, %s85, [#allocation5]
    $region29: #{tpu_custom_call.1} parent=1 // pred_fallthru
      _
    // Predicated region
    $region30: #{tpu_custom_call.1} parent=1 // pred_check
      _
    $region31: #{tpu_custom_call.1} parent=1 // pred_check_branch
      %89 = sbr.rel (0) target = $region33
    $region32: #{tpu_custom_call.1} parent=1 // pred_region
      %91 = dma.done [#allocation5], 16
    $region33: #{tpu_custom_call.1} parent=1 // pred_fallthru
      _
    %92 = vsyncpa [#allocation4], 1
    %93 = vsyncpa [#allocation7], 1
    %94 = vsyncpa [#allocation5], 1

</llo_original>
